<compile_context>
chip_gen: v5e
topology: v5e:2x2
jax: 0.10.0
libtpu: 0.0.40
codegen_flags: <defaults>
</compile_context>

<pallas_src>
import functools

import jax
import jax.numpy as jnp
from jax.experimental import pallas as pl
from jax.experimental.pallas import tpu as pltpu


def _mask_relu_kernel(x_ref, o_ref, *, H, W):
    # x_ref block: (nb, C, H*W), lane-dense in H*W.
    x = x_ref[...]
    # Channel sum per (n, h*W + w); cast fuses into the reduction (no full f32 copy).
    s = jnp.sum(x, axis=1, dtype=jnp.float32)              # (nb, HW)

    HW = H * W

    def lane_roll(v, shift):
        # Static cyclic roll along the last (lane) axis; portable (interpret + Mosaic).
        shift = shift % HW
        return jnp.roll(v, shift, axis=-1) if shift else v

    # Column sum over H, already broadcast back over h, entirely on the flat lane axis:
    #   sum_{d=0}^{H-1} roll(s, d*W)[h*W + w] == sum_{h'} s[h'*W + w]
    # computed with an O(log H) binary tree (doubling windows + binary-decomposition
    # remainder) instead of an O(H) roll chain.
    col_sum = None
    acc, length, offset, rem = s, 1, 0, H
    while rem:
        if rem & 1:
            piece = lane_roll(acc, offset * W)
            col_sum = piece if col_sum is None else col_sum + piece
            offset += length
        rem >>= 1
        if rem:
            acc = acc + lane_roll(acc, length * W)
            length *= 2

    # keep  <=>  s > col_sum / H   (multiply + compare, no full-width divide).
    keep = s * jnp.float32(H) > col_sum                     # (nb, HW) bool
    o_ref[...] = jnp.where(keep[:, None, :], x, jnp.zeros((), x.dtype))


def _vmem_capacity_bytes():
    try:
        info = pltpu.get_tpu_info()
        cap = getattr(info, "vmem_capacity_bytes", None)
        if cap:
            return int(cap)
    except Exception:
        pass
    return 64 * 1024 * 1024  # unknown backend -> assume the smallest (v7x-class) part


def _choose_batch_block(N, bytes_per_n, block_budget_bytes, target_steps,
                        min_block_bytes=1 << 20):
    # in + out, double buffered => 4 resident copies of the block in VMEM.
    nb = max(1, min(N, block_budget_bytes // (4 * bytes_per_n)))
    # Prefer >= target_steps grid steps so read DMA / compute / writeback overlap in
    # steady state, as long as blocks stay large enough to amortize per-step overhead.
    nb_steps = max(1, N // target_steps)
    if nb_steps * bytes_per_n >= min_block_bytes:
        nb = min(nb, nb_steps)
    while N % nb:  # keep uniform blocks (nb must divide N)
        nb -= 1
    return nb


def mask_relu(x):
    N, C, H, W = x.shape
    HW = H * W
    xf = x.reshape(N, C, HW)                 # free: contiguous view of NCHW
    itemsize = jnp.dtype(x.dtype).itemsize
    bytes_per_n = C * HW * itemsize

    cap = _vmem_capacity_bytes()
    if cap <= 64 * 1024 * 1024:              # v7x-class: 64 MiB VMEM, 2 TensorCores
        vmem_limit = 48 * 1024 * 1024
        block_budget = 20 * 1024 * 1024
        target_steps = 8
    else:                                    # v5e / v6e: 128 MiB VMEM, 1 TensorCore
        vmem_limit = 96 * 1024 * 1024
        block_budget = 64 * 1024 * 1024
        target_steps = 4

    nb = _choose_batch_block(N, bytes_per_n, block_budget, target_steps)
    # TODO(synk): if a single image overflows the per-buffer budget (4*bytes_per_n >
    # block_budget), switch to a two-pass C-tiled scheme: pass 1 streams x and writes only
    # the tiny per-(n,w) threshold; pass 2 applies the mask elementwise.
    grid = (N // nb,)

    out = pl.pallas_call(
        functools.partial(_mask_relu_kernel, H=H, W=W),
        out_shape=jax.ShapeDtypeStruct((N, C, HW), x.dtype),
        grid_spec=pltpu.PrefetchScalarGridSpec(
            num_scalar_prefetch=0,
            grid=grid,
            in_specs=[pl.BlockSpec((nb, C, HW), lambda n: (n, 0, 0))],
            out_specs=pl.BlockSpec((nb, C, HW), lambda n: (n, 0, 0)),
        ),
        compiler_params=pltpu.CompilerParams(
            dimension_semantics=("parallel",),
            vmem_limit_bytes=vmem_limit,
        ),
        cost_estimate=pl.CostEstimate(
            flops=N * C * HW,
            transcendentals=0,
            bytes_accessed=2 * N * C * HW * itemsize,
        ),
    )(xf)
    return out.reshape(N, C, H, W)


def mask_relu_ref(x):
    # Pure-JAX reference mirroring the PyTorch forward exactly.
    s = jnp.sum(x, axis=1, keepdims=True)
    t = jnp.mean(jnp.mean(s, axis=1, keepdims=True), axis=2, keepdims=True)
    mask = (s > t).astype(x.dtype)
    return x * mask


if __name__ == "__main__":
    key = jax.random.PRNGKey(0)
    N, C, H, W = 2, 4, 16, 16
    x = jax.random.normal(key, (N, C, H, W), dtype=jnp.float32)

    out = jax.block_until_ready(mask_relu(x))
    ref = mask_relu_ref(x)

    assert out.shape == (N, C, H, W)
    assert jnp.allclose(out, ref, atol=1e-5, rtol=1e-5), "mismatch vs reference"

    print("KERNEL_OK")
</pallas_src>

<mosaic_0001>
module attributes {stable_mosaic.version = 11 : i64} {
  func.func @_mask_relu_kernel(%arg0: i32, %arg1: memref<2x4x256xf32, #tpu.memory_space<vmem>>, %arg2: memref<2x4x256xf32, #tpu.memory_space<vmem>>) attributes {dimension_semantics = [#tpu.dimension_semantics<parallel>], iteration_bounds = array<i64: 1>, scalar_prefetch = 0 : i64, scratch_operands = 0 : i64, tpu.core_type = #tpu.core_type<tc>, window_params = [{transform_indices = @transform_0, window_bounds = array<i64: 2, 4, 256>}, {transform_indices = @transform_1, window_bounds = array<i64: 2, 4, 256>}]} {
    %c0 = arith.constant 0 : index
    %c0_0 = arith.constant 0 : index
    %c0_1 = arith.constant 0 : index
    %0 = vector.load %arg1[%c0, %c0_0, %c0_1] : memref<2x4x256xf32, #tpu.memory_space<vmem>>, vector<2x4x256xf32>
    %cst = arith.constant dense<0.000000e+00> : vector<2x256xf32>
    %1 = vector.multi_reduction <add>, %0, %cst [1] : vector<2x4x256xf32> to vector<2x256xf32>
    %2 = vector.extract_strided_slice %1 {offsets = [0, 240], sizes = [2, 16], strides = [1, 1]} : vector<2x256xf32> to vector<2x16xf32>
    %3 = vector.extract_strided_slice %1 {offsets = [0, 0], sizes = [2, 240], strides = [1, 1]} : vector<2x256xf32> to vector<2x240xf32>
    %4 = tpu.concatenate %2, %3 in 1 : vector<2x16xf32>, vector<2x240xf32> -> vector<2x256xf32>
    %5 = arith.addf %1, %4 : vector<2x256xf32>
    %6 = vector.extract_strided_slice %5 {offsets = [0, 224], sizes = [2, 32], strides = [1, 1]} : vector<2x256xf32> to vector<2x32xf32>
    %7 = vector.extract_strided_slice %5 {offsets = [0, 0], sizes = [2, 224], strides = [1, 1]} : vector<2x256xf32> to vector<2x224xf32>
    %8 = tpu.concatenate %6, %7 in 1 : vector<2x32xf32>, vector<2x224xf32> -> vector<2x256xf32>
    %9 = arith.addf %5, %8 : vector<2x256xf32>
    %10 = vector.extract_strided_slice %9 {offsets = [0, 192], sizes = [2, 64], strides = [1, 1]} : vector<2x256xf32> to vector<2x64xf32>
    %11 = vector.extract_strided_slice %9 {offsets = [0, 0], sizes = [2, 192], strides = [1, 1]} : vector<2x256xf32> to vector<2x192xf32>
    %12 = tpu.concatenate %10, %11 in 1 : vector<2x64xf32>, vector<2x192xf32> -> vector<2x256xf32>
    %13 = arith.addf %9, %12 : vector<2x256xf32>
    %14 = vector.extract_strided_slice %13 {offsets = [0, 128], sizes = [2, 128], strides = [1, 1]} : vector<2x256xf32> to vector<2x128xf32>
    %15 = vector.extract_strided_slice %13 {offsets = [0, 0], sizes = [2, 128], strides = [1, 1]} : vector<2x256xf32> to vector<2x128xf32>
    %16 = tpu.concatenate %14, %15 in 1 : vector<2x128xf32>, vector<2x128xf32> -> vector<2x256xf32>
    %17 = arith.addf %13, %16 : vector<2x256xf32>
    %cst_2 = arith.constant 1.600000e+01 : f32
    %18 = vector.broadcast %cst_2 : f32 to vector<2x256xf32>
    %19 = arith.mulf %1, %18 : vector<2x256xf32>
    %20 = arith.cmpf ogt, %19, %17 : vector<2x256xf32>
    %21 = vector.shape_cast %20 : vector<2x256xi1> to vector<2x1x256xi1>
    %cst_3 = arith.constant 0.000000e+00 : f32
    %22 = vector.shape_cast %21 : vector<2x1x256xi1> to vector<2x1x256xi1>
    %23 = vector.broadcast %22 : vector<2x1x256xi1> to vector<2x4x256xi1>
    %24 = vector.broadcast %cst_3 : f32 to vector<2x4x256xf32>
    %25 = arith.select %23, %0, %24 : vector<2x4x256xi1>, vector<2x4x256xf32>
    %c0_4 = arith.constant 0 : index
    %c0_5 = arith.constant 0 : index
    %c0_6 = arith.constant 0 : index
    %26 = vector.load %arg2[%c0_4, %c0_5, %c0_6] : memref<2x4x256xf32, #tpu.memory_space<vmem>>, vector<2x4x256xf32>
    tpu.vector_store %arg2[%c0_4, %c0_5, %c0_6], %25 {strides = array<i32>} : memref<2x4x256xf32, #tpu.memory_space<vmem>>, vector<2x4x256xf32>,
    return
  }
  func.func @transform_0(%arg0: i32) -> (i32, i32, i32) {
    %c0_i32 = arith.constant 0 : i32
    %c0_i32_0 = arith.constant 0 : i32
    %c0_i32_1 = arith.constant 0 : i32
    return %arg0, %c0_i32, %c0_i32_0 : i32, i32, i32
  }
  func.func @transform_1(%arg0: i32) -> (i32, i32, i32) {
    %c0_i32 = arith.constant 0 : i32
    %c0_i32_0 = arith.constant 0 : i32
    %c0_i32_1 = arith.constant 0 : i32
    return %arg0, %c0_i32, %c0_i32_0 : i32, i32, i32
  }
}

</mosaic_0001>

<llo_original>
// kernel: tpu_custom_call.1
$region0: #{tpu_custom_call.1}
  #allocation0 [shape = 'u32[]', space=smem, size = 0x4, offset = 0x4, fixed_abs, tag = 'smem constant byte address 0x4 - core index']
  #allocation1 [shape = 'u32[72,128]{1,0:T(1,128)}', space=vmem, size = 0x9000, scoped, tag = 'internal scratch']
  %s0 = inlined_call_operand.hbm [shape: f32[2,4,256], index: 0, kind: input, shape index: {}]
  %s1 = inlined_call_operand.hbm [shape: f32[2,4,256], index: 1, kind: output, shape index: {}]
  %s2 = sld [smem:[#allocation0]]
  $region18: #{tpu_custom_call.1} parent=0
    _
  %s4 = ssub.s32 1, %s2
  %s5 = scalar_select 0, %s4, %s2
  $region1: #{tpu_custom_call.1} parent=0
    #allocation2 [shape = 'u8[8192]{0}', space=vmem, size = 0x2000, scoped, tag = 'input window, operand 0, single buffered']
    #allocation3 [shape = 's32[1]{0}', space=sflag, size = 0x4, scoped, tag = 'scoped memory for tpu_custom_call.1']
    #allocation4 [shape = 's32[1]{0}', space=sflag, size = 0x4, scoped, tag = 'scoped memory for tpu_custom_call.1']
    #allocation5 [shape = 'u8[8192]{0}', space=vmem, size = 0x2000, scoped, tag = 'output window, operand 0, single buffered']
    %6 = vsyncpa [#allocation3], 0
    %7 = vsyncpa [#allocation4], 0
    // Predicated region
    $region2: #{tpu_custom_call.1} parent=1 // pred_check
      _
    $region3: #{tpu_custom_call.1} parent=1 // pred_check_branch
      %9 = sbr.rel (0) target = $region5
    $region4: #{tpu_custom_call.1} parent=1 // pred_region
      %11 = vsyncadd [#allocation3], 0
      %s12 = sshll.u32 %s0, 4
      %s13 = int_to_ptr.hbm [resolvable:$true] %s12
      %s14 = sshll.u32 [#allocation2], 4
      %s15 = int_to_ptr.vmem [resolvable:$true] %s14
      %20 = dma.hbm_to_vmem [thread:$0]  %s13, 256, %s15, [#allocation3], 128, 128, 8
    $region5: #{tpu_custom_call.1} parent=1 // pred_fallthru
      _
    // Predicated region
    $region6: #{tpu_custom_call.1} parent=1 // pred_check
      _
    $region7: #{tpu_custom_call.1} parent=1 // pred_check_branch
      %22 = sbr.rel (0) target = $region9
    $region8: #{tpu_custom_call.1} parent=1 // pred_region
      %24 = dma.done [#allocation3], 256
    $region9: #{tpu_custom_call.1} parent=1 // pred_fallthru
      _
    %v25 = vld [vmem:[#allocation2] sm:$0xff]
    %v26 = vld [vmem:[#allocation2 + $0x8] sm:$0xff]
    %29 = vst [vmem:[#allocation1] ss:$2 sm:$0xff] %v25
    %v30 = vld.sshfl [vmem:[#allocation1] sm:$0xff pattern:$0x75316420]
    %v31 = vld.sshfl [vmem:[#allocation1 + $0x8] sm:$0xff pattern:$0x75316420]
    %s32 = scalar_lea.vmem [#allocation1], 16
    %33 = vst [vmem:[%s32] ss:$2 sm:$0xff] %v26
    %v34 = vld.sshfl [vmem:[#allocation1 + $0x10] sm:$0xff pattern:$0x75316420]
    %v35 = vld.sshfl [vmem:[#allocation1 + $0x18] sm:$0xff pattern:$0x75316420]
    %vm40 = vcmask 1043456
    %v41 = vsel %vm40, %v30, 0.0
    %v42 = vrot.slane %v41, 4
    %v43 = vadd.f32 %v41, %v42
    %v44 = vrot.slane %v43, 2
    %v45 = vadd.f32 %v43, %v44
    %v46 = vrot.slane %v45, 1
    %v47 = vadd.f32 %v45, %v46
    %v48 = vsel %vm40, %v31, 0.0
    %v49 = vrot.slane %v48, 4
    %v50 = vadd.f32 %v48, %v49
    %v51 = vrot.slane %v50, 2
    %v52 = vadd.f32 %v50, %v51
    %v53 = vrot.slane %v52, 1
    %v54 = vadd.f32 %v52, %v53
    %v55 = vsel %vm40, %v34, 0.0
    %v56 = vrot.slane %v55, 4
    %v57 = vadd.f32 %v55, %v56
    %v58 = vrot.slane %v57, 2
    %v59 = vadd.f32 %v57, %v58
    %v60 = vrot.slane %v59, 1
    %v61 = vadd.f32 %v59, %v60
    %v62 = vsel %vm40, %v35, 0.0
    %v63 = vrot.slane %v62, 4
    %v64 = vadd.f32 %v62, %v63
    %v65 = vrot.slane %v64, 2
    %v66 = vadd.f32 %v64, %v65
    %v67 = vrot.slane %v66, 1
    %v68 = vadd.f32 %v66, %v67
    %vm71 = vcmask 1041409
    %v72 = vsel %vm71, %v68, %v54
    %73 = vrot.lane.b32.xlu0 %v72, 16
    %v74 = vpop.permute.xlu0 %73
    %v78 = vsel %vm71, %v61, %v47
    %79 = vrot.lane.b32.xlu0 %v78, 16
    %v80 = vpop.permute.xlu0 %79
    %vm81 = vcmask 130048
    %v82 = vsel %vm81, %v80, %v74
    %v84 = vsel %vm81, %v74, %v80
    %v86 = vrot.slane %v84, 1
    %v87 = vrot.slane %v82, 1
    %v92 = vadd.f32 %v47, %v84
    %v93 = vadd.f32 %v54, %v82
    %v94 = vadd.f32 %v61, %v86
    %v95 = vadd.f32 %v68, %v87
    %v98 = vrot.slane %v95, 7
    %v99 = vsel %vm71, %v98, %v93
    %100 = vrot.lane.b32.xlu0 %v99, 32
    %v101 = vpop.permute.xlu0 %100
    %v105 = vrot.slane %v94, 7
    %v106 = vsel %vm71, %v105, %v92
    %107 = vrot.lane.b32.xlu0 %v106, 32
    %v108 = vpop.permute.xlu0 %107
    %vm109 = vcmask 261120
    %v110 = vsel %vm109, %v108, %v101
    %v112 = vsel %vm109, %v101, %v108
    %v114 = vrot.slane %v112, 1
    %v115 = vrot.slane %v110, 1
    %v120 = vadd.f32 %v92, %v112
    %v121 = vadd.f32 %v93, %v110
    %v122 = vadd.f32 %v94, %v114
    %v123 = vadd.f32 %v95, %v115
    %v126 = vrot.slane %v123, 7
    %v127 = vsel %vm71, %v126, %v121
    %128 = vrot.lane.b32.xlu0 %v127, 64
    %v129 = vpop.permute.xlu0 %128
    %v133 = vrot.slane %v122, 7
    %v134 = vsel %vm71, %v133, %v120
    %135 = vrot.lane.b32.xlu0 %v134, 64
    %v136 = vpop.permute.xlu0 %135
    %vm137 = vcmask 523264
    %v138 = vsel %vm137, %v136, %v129
    %v140 = vsel %vm137, %v129, %v136
    %v142 = vrot.slane %v140, 1
    %v143 = vrot.slane %v138, 1
    %v148 = vadd.f32 %v120, %v140
    %v149 = vadd.f32 %v121, %v138
    %v150 = vadd.f32 %v122, %v142
    %v151 = vadd.f32 %v123, %v143
    %v154 = vrot.slane %v151, 7
    %v155 = vsel %vm71, %v154, %v149
    %v158 = vrot.slane %v150, 7
    %v159 = vsel %vm71, %v158, %v148
    %v160 = vrot.slane %v155, 1
    %v161 = vrot.slane %v159, 1
    %v166 = vadd.f32 %v148, %v155
    %v167 = vadd.f32 %v149, %v159
    %v168 = vadd.f32 %v150, %v160
    %v169 = vadd.f32 %v151, %v161
    %v170 = vmul.f32 %v47, 16.0
    %v171 = vmul.f32 %v54, 16.0
    %v172 = vmul.f32 %v61, 16.0
    %v173 = vmul.f32 %v68, 16.0
    %vm174 = vcmp.gt.f32.partialorder %v170, %v166
    %vm175 = vcmp.gt.f32.partialorder %v171, %v167
    %vm176 = vcmp.gt.f32.partialorder %v172, %v168
    %vm177 = vcmp.gt.f32.partialorder %v173, %v169
    %v178 = vsel %vm174, 1, 0
    %v179 = vsel %vm175, 1, 0
    %v180 = vsel %vm176, 1, 0
    %v181 = vsel %vm177, 1, 0
    %v182 = vperm.slane %v178, 0
    %v183 = vperm.slane %v179, 0
    %v184 = vperm.slane %v180, 0
    %v185 = vperm.slane %v181, 0
    %vm186 = vcmp.eq.s32.totalorder %v182, 1
    %vm187 = vcmp.eq.s32.totalorder %v183, 1
    %vm188 = vcmp.eq.s32.totalorder %v184, 1
    %vm189 = vcmp.eq.s32.totalorder %v185, 1
    %190 = vst [vmem:[#allocation1] ss:$2 sm:$0xff] %v25
    %v191 = vld.sshfl [vmem:[#allocation1] sm:$0xff pattern:$0x75316420]
    %v192 = vld.sshfl [vmem:[#allocation1 + $0x8] sm:$0xff pattern:$0x75316420]
    %s193 = scalar_lea.vmem [#allocation1], 16
    %194 = vst [vmem:[%s193] ss:$2 sm:$0xff] %v26
    %v195 = vld.sshfl [vmem:[#allocation1 + $0x10] sm:$0xff pattern:$0x75316420]
    %v196 = vld.sshfl [vmem:[#allocation1 + $0x18] sm:$0xff pattern:$0x75316420]
    %v201 = vsel %vm186, %v191, 0.0
    %v202 = vsel %vm187, %v192, 0.0
    %v203 = vsel %vm188, %v195, 0.0
    %v204 = vsel %vm189, %v196, 0.0
    %v209 = vrot.slane %v202, 4
    %v210 = vrot.slane %v204, 4
    %v211 = vsel %vm40, %v201, %v209
    %v212 = vsel %vm40, %v203, %v210
    %215 = vst [vmem:[#allocation5] sm:$0xff] %v211
    %216 = vst [vmem:[#allocation5 + $0x8] sm:$0xff] %v212
    // Predicated region
    $region10: #{tpu_custom_call.1} parent=1 // pred_check
      _
    $region11: #{tpu_custom_call.1} parent=1 // pred_check_branch
      %218 = sbr.rel (0) target = $region13
    $region12: #{tpu_custom_call.1} parent=1 // pred_region
      %220 = vsyncadd [#allocation4], 0
      %s221 = sshll.u32 [#allocation5], 4
      %s222 = int_to_ptr.vmem [resolvable:$true] %s221
      %s223 = sshll.u32 %s1, 4
      %s224 = int_to_ptr.hbm [resolvable:$true] %s223
      %229 = dma.vmem_to_hbm [thread:$0]  %s222, 256, %s224, [#allocation4], 128, 128, 8
    $region13: #{tpu_custom_call.1} parent=1 // pred_fallthru
      _
    // Predicated region
    $region14: #{tpu_custom_call.1} parent=1 // pred_check
      _
    $region15: #{tpu_custom_call.1} parent=1 // pred_check_branch
      %231 = sbr.rel (0) target = $region17
    $region16: #{tpu_custom_call.1} parent=1 // pred_region
      %233 = dma.done [#allocation4], 256
    $region17: #{tpu_custom_call.1} parent=1 // pred_fallthru
      _
    %234 = vsyncpa [#allocation3], 1
    %235 = vsyncpa [#allocation4], 1

</llo_original>
